<compile_context>
chip_gen: v7x
topology: tpu7x:2x2x1
jax: 0.10.0
libtpu: 0.0.40
codegen_flags: <defaults>
</compile_context>

<pallas_src>
import functools
import math

import numpy as np
import jax
import jax.numpy as jnp
from jax.experimental import pallas as pl
from jax.experimental.pallas import tpu as pltpu


# ----------------------------------------------------------------------------
# Pallas kernel: full DiscHead forward for one (small) batch.
# ----------------------------------------------------------------------------
def disc_head_kernel(G, eps, neg_slope, inv_sqrt_cmap,
                     x_ref, c_ref,
                     w1_ref, b1_ref, g1_ref, e1_ref,
                     w2s_ref, b2_ref, g2_ref, e2_ref,
                     wcls_ref, bcls_ref, wmap_ref, bmap_ref,
                     out_ref):
    x = x_ref[...]                                   # (B, T, C) float32
    B, T, C = x.shape

    def mm2d(lhs, w_bf16):
        # bf16 x bf16 MXU matmul with f32 accumulation.
        return jnp.dot(lhs.astype(jnp.bfloat16), w_bf16,
                       preferred_element_type=jnp.float32)

    def chan_mm(h, w_bf16):
        # (B, T, Ci) x (Ci, Co) -> (B, T, Co)
        Ci = h.shape[-1]
        y = mm2d(h.reshape(B * T, Ci), w_bf16)
        return y.reshape(B, T, w_bf16.shape[-1])

    def bn_local(h, gamma, beta):
        # PyTorch BatchNormLocal: G = ceil(B / virtual_bs); x.view(G, -1, C, T)
        # => group size is B // G (view() hard-fails otherwise, same as the
        # wrapper assert).  Per-channel stats over (batch-in-group, time),
        # biased variance (unbiased=False).
        Bg = B // G
        hg = h.reshape(G, Bg * T, C)
        m = jnp.mean(hg, axis=1, keepdims=True)                 # (G, 1, C)
        msq = jnp.mean(hg * hg, axis=1, keepdims=True)
        v = msq - m * m                                         # E[x^2]-E[x]^2
        hn = (hg - m) * jax.lax.rsqrt(v + eps)                  # rsqrt -> EUP
        return hn.reshape(B, T, C) * gamma + beta               # (1, C) affine

    def lrelu(h):
        return jnp.where(h >= 0, h, neg_slope * h)

    # ---- block 1: SpectralConv1d(k=1) + BatchNormLocal + LeakyReLU(0.2) ----
    h1 = chan_mm(x, w1_ref[...]) + b1_ref[...]
    h1 = lrelu(bn_local(h1, g1_ref[...], e1_ref[...]))

    # ---- block 2 (ResidualBlock): SpectralConv1d(k=9, circular) + BN + LReLU
    # Circular conv expressed as ONE stacked matmul: tap k reads
    # h1[(t + k - P) mod T]  ==  roll(h1, shift=(P - k) mod T, axis=time).
    K = w2s_ref.shape[0] // C
    P = K // 2
    taps = [h1 if k == P else pltpu.roll(h1, shift=(P - k) % T, axis=1)
            for k in range(K)]
    im2col = jnp.concatenate(taps, axis=-1)          # (B, T, K*C) lane-stacked
    h2 = chan_mm(im2col, w2s_ref[...]) + b2_ref[...]
    h2 = lrelu(bn_local(h2, g2_ref[...], e2_ref[...]))
    # TODO(synk): ResidualBlock source not provided; assuming StyleGAN-T
    #             definition: (x + fn(x)) / sqrt(2).
    h2 = (h2 + h1) * (1.0 / math.sqrt(2.0))

    # ---- cls: SpectralConv1d(k=1) -> (B, T, cmap_dim) ----
    o = chan_mm(h2, wcls_ref[...]) + bcls_ref[...]

    # ---- cmapper (FC) + projection: (out * cmap).sum(channel) / sqrt(M) ----
    # TODO(synk): FullyConnectedLayer source not provided; StyleGAN-T weight
    #             gain 1/sqrt(in_features) is folded into wmap in the wrapper.
    cm = mm2d(c_ref[...], wmap_ref[...]) + bmap_ref[...]        # (B, M)
    # Lane (channel) reduction on the XLU; output last dim is T (lane-sparse at
    # toy shapes — production T should be a multiple of 128 for dense stores).
    out_ref[...] = jnp.sum(o * cm[:, None, :], axis=-1) * inv_sqrt_cmap


# ----------------------------------------------------------------------------
# Wrapper: parameter setup (spectral norm) + pallas_call
# ----------------------------------------------------------------------------
def _l2_normalize(v, eps=1e-12):
    return v / jnp.maximum(jnp.linalg.norm(v), eps)


def spectral_normalize(w, u, n_iter=1, eps=1e-12):
    """PyTorch SpectralNorm (dim=0): one power iteration, w / sigma.
    Note: matches a single training-mode forward with the given u buffer; the
    updated u is not persisted here (stateless parameter prep)."""
    co = w.shape[0]
    wm = w.reshape(co, -1)
    v = None
    for _ in range(n_iter):
        v = _l2_normalize(wm.T @ u, eps)
        u = _l2_normalize(wm @ v, eps)
    sigma = jnp.dot(u, wm @ v)
    return w / sigma


def _full_spec(shape):
    nd = len(shape)
    return pl.BlockSpec(shape, lambda i, nd=nd: (0,) * nd)


def disc_head_forward(x_ncl, c, params, virtual_bs=8, eps=1e-5):
    B, C, T = x_ncl.shape
    M = params["wcls_t"].shape[-1]
    K = params["w2_t"].shape[0]
    G = int(math.ceil(B / virtual_bs))
    # Mirrors PyTorch BatchNormLocal's x.view(G, -1, C, T), which also requires
    # B % G == 0; group size is B // G.
    assert B % G == 0

    # NCL -> (B, T, C).
    # TODO(synk): keep activations channels-last upstream (or fuse a per-tile
    # transpose into the kernel DMA) to remove this extra HBM pass.
    x_btc = jnp.transpose(x_ncl, (0, 2, 1))

    # Matmul operands in bf16 (f32 accumulation in-kernel); biases / BN affine
    # stay f32 because all elementwise math runs in f32.
    bf = lambda a: a.astype(jnp.bfloat16)
    w1 = bf(params["w1_t"])                            # (Cin, Cout)
    w2s = bf(params["w2_t"].reshape(K * C, C))         # (K*Cin, Cout) stacked
    wcls = bf(params["wcls_t"])                        # (Cin, M)
    wmap = bf(params["wmap_t"])                        # (c_dim, M)

    args = (
        x_btc, c,
        w1, params["b1"], params["g1"], params["e1"],
        w2s, params["b2"], params["g2"], params["e2"],
        wcls, params["bcls"], wmap, params["bmap"],
    )

    kernel = functools.partial(disc_head_kernel, G, eps, 0.2,
                               1.0 / math.sqrt(M))

    out_bt = pl.pallas_call(
        kernel,
        out_shape=jax.ShapeDtypeStruct((B, T), jnp.float32),
        grid=(1,),
        in_specs=[_full_spec(a.shape) for a in args],
        out_specs=_full_spec((B, T)),
        compiler_params=pltpu.CompilerParams(
            dimension_semantics=("arbitrary",),
            vmem_limit_bytes=32 * 1024 * 1024),
    )(*args)

    return out_bt[:, None, :]                          # (B, 1, T) as in PyTorch


# ----------------------------------------------------------------------------
# Plain-JAX reference (same math, f32 high-precision, independent construction:
# circular pad + per-tap slices, per-group BN loop) for sanity check.
# ----------------------------------------------------------------------------
def disc_head_reference(x_ncl, c, p, virtual_bs=8, eps=1e-5):
    hp = jax.lax.Precision.HIGHEST
    x = jnp.transpose(x_ncl, (0, 2, 1))
    B, T, C = x.shape
    G = int(math.ceil(B / virtual_bs))

    def mm(h, w_t):
        return jnp.einsum("btc,cd->btd", h, w_t, precision=hp)

    def bn(h, g, b):
        Bg = B // G
        outs = []
        for gi in range(G):
            hg = h[gi * Bg:(gi + 1) * Bg]
            m = hg.mean(axis=(0, 1), keepdims=True)
            v = ((hg - m) ** 2).mean(axis=(0, 1), keepdims=True)
            outs.append((hg - m) / jnp.sqrt(v + eps))
        hn = outs[0] if G == 1 else jnp.concatenate(outs, 0)
        return hn * g + b

    lrelu = lambda h: jnp.where(h >= 0, h, 0.2 * h)

    h1 = lrelu(bn(mm(x, p["w1_t"]) + p["b1"], p["g1"], p["e1"]))
    K = p["w2_t"].shape[0]; P = K // 2
    xp = jnp.concatenate([h1[:, T - P:], h1, h1[:, :P]], axis=1)
    h2 = jnp.broadcast_to(p["b2"], (B, T, C)).astype(jnp.float32)
    for k in range(K):
        h2 = h2 + mm(xp[:, k:k + T], p["w2_t"][k])
    h2 = lrelu(bn(h2, p["g2"], p["e2"]))
    h2 = (h2 + h1) / math.sqrt(2.0)
    o = mm(h2, p["wcls_t"]) + p["bcls"]
    cm = jnp.einsum("bi,im->bm", c, p["wmap_t"], precision=hp) + p["bmap"]
    M = p["wcls_t"].shape[-1]
    return (jnp.sum(o * cm[:, None, :], axis=-1) / math.sqrt(M))[:, None, :]


# ----------------------------------------------------------------------------
if __name__ == "__main__":
    B, C, T = 2, 32, 16          # batch, channels, sequence length
    c_dim, cmap_dim = 8, 64
    K = 9                        # second block kernel size

    key = jax.random.PRNGKey(0)
    ks = jax.random.split(key, 12)

    # inputs (x in PyTorch NCL layout)
    x_ncl = jax.random.normal(ks[0], (B, C, T), jnp.float32)
    c = jax.random.normal(ks[1], (B, c_dim), jnp.float32)

    # --- deterministic parameter init (shapes from DiscHead.__init__) ---
    # SpectralConv1d(C, C, k=1)
    w1_raw = jax.random.normal(ks[2], (C, C, 1), jnp.float32) * 0.2
    u1 = _l2_normalize(jax.random.normal(ks[3], (C,), jnp.float32))
    b1 = jax.random.normal(ks[4], (C,), jnp.float32) * 0.1
    # SpectralConv1d(C, C, k=9)
    w2_raw = jax.random.normal(ks[5], (C, C, K), jnp.float32) * 0.1
    u2 = _l2_normalize(jax.random.normal(ks[6], (C,), jnp.float32))
    b2 = jax.random.normal(ks[7], (C,), jnp.float32) * 0.1
    # cls: SpectralConv1d(C, cmap_dim, k=1)
    wc_raw = jax.random.normal(ks[8], (cmap_dim, C, 1), jnp.float32) * 0.2
    uc = _l2_normalize(jax.random.normal(ks[9], (cmap_dim,), jnp.float32))
    bc = jax.random.normal(ks[10], (cmap_dim,), jnp.float32) * 0.1
    # cmapper: FullyConnectedLayer(c_dim, cmap_dim) (weight gain 1/sqrt(c_dim))
    wmap_raw = jax.random.normal(ks[11], (cmap_dim, c_dim), jnp.float32)
    wmap_eff = wmap_raw / math.sqrt(c_dim)
    bmap = jnp.zeros((cmap_dim,), jnp.float32)
    # BatchNormLocal affine params (module init: ones / zeros)
    g1 = jnp.ones((C,), jnp.float32);  e1 = jnp.zeros((C,), jnp.float32)
    g2 = jnp.ones((C,), jnp.float32);  e2 = jnp.zeros((C,), jnp.float32)

    # spectral-norm the conv weights (param setup, plain JAX)
    w1 = spectral_normalize(w1_raw, u1)              # (C, C, 1)
    w2 = spectral_normalize(w2_raw, u2)              # (C, C, 9)
    wc = spectral_normalize(wc_raw, uc)              # (M, C, 1)

    params = {
        # weights pre-transposed so the kernel does x @ W
        "w1_t": jnp.transpose(w1[:, :, 0], (1, 0)),                  # (Cin, Cout)
        "b1": b1[None, :], "g1": g1[None, :], "e1": e1[None, :],
        "w2_t": jnp.transpose(w2, (2, 1, 0)),                        # (K, Cin, Cout)
        "b2": b2[None, :], "g2": g2[None, :], "e2": e2[None, :],
        "wcls_t": jnp.transpose(wc[:, :, 0], (1, 0)),                # (Cin, M)
        "bcls": bc[None, :],
        "wmap_t": jnp.transpose(wmap_eff, (1, 0)),                   # (c_dim, M)
        "bmap": bmap[None, :],
    }

    out = disc_head_forward(x_ncl, c, params)
    out = jax.block_until_ready(out)
    assert out.shape == (B, 1, T)

    ref = jax.block_until_ready(disc_head_reference(x_ncl, c, params))
    np.testing.assert_allclose(np.asarray(out), np.asarray(ref),
                               rtol=5e-2, atol=5e-2)

    print("KERNEL_OK")
</pallas_src>

<mosaic_0001>
module attributes {stable_mosaic.version = 11 : i64} {
  func.func @disc_head_kernel(%arg0: i32, %arg1: memref<2x16x32xf32, #tpu.memory_space<vmem>>, %arg2: memref<2x8xf32, #tpu.memory_space<vmem>>, %arg3: memref<32x32xbf16, #tpu.memory_space<vmem>>, %arg4: memref<1x32xf32, #tpu.memory_space<vmem>>, %arg5: memref<1x32xf32, #tpu.memory_space<vmem>>, %arg6: memref<1x32xf32, #tpu.memory_space<vmem>>, %arg7: memref<288x32xbf16, #tpu.memory_space<vmem>>, %arg8: memref<1x32xf32, #tpu.memory_space<vmem>>, %arg9: memref<1x32xf32, #tpu.memory_space<vmem>>, %arg10: memref<1x32xf32, #tpu.memory_space<vmem>>, %arg11: memref<32x64xbf16, #tpu.memory_space<vmem>>, %arg12: memref<1x64xf32, #tpu.memory_space<vmem>>, %arg13: memref<8x64xbf16, #tpu.memory_space<vmem>>, %arg14: memref<1x64xf32, #tpu.memory_space<vmem>>, %arg15: memref<2x16xf32, #tpu.memory_space<vmem>>) attributes {dimension_semantics = [#tpu.dimension_semantics<arbitrary>], iteration_bounds = array<i64: 1>, scalar_prefetch = 0 : i64, scratch_operands = 0 : i64, tpu.core_type = #tpu.core_type<tc>, window_params = [{pipeline_mode = #tpu.pipeline_mode<synchronous>, transform_indices = @transform_0, window_bounds = array<i64: 2, 16, 32>}, {pipeline_mode = #tpu.pipeline_mode<synchronous>, transform_indices = @transform_1, window_bounds = array<i64: 2, 8>}, {pipeline_mode = #tpu.pipeline_mode<synchronous>, transform_indices = @transform_2, window_bounds = array<i64: 32, 32>}, {pipeline_mode = #tpu.pipeline_mode<synchronous>, transform_indices = @transform_3, window_bounds = array<i64: 1, 32>}, {pipeline_mode = #tpu.pipeline_mode<synchronous>, transform_indices = @transform_4, window_bounds = array<i64: 1, 32>}, {pipeline_mode = #tpu.pipeline_mode<synchronous>, transform_indices = @transform_5, window_bounds = array<i64: 1, 32>}, {pipeline_mode = #tpu.pipeline_mode<synchronous>, transform_indices = @transform_6, window_bounds = array<i64: 288, 32>}, {pipeline_mode = #tpu.pipeline_mode<synchronous>, transform_indices = @transform_7, window_bounds = array<i64: 1, 32>}, {pipeline_mode = #tpu.pipeline_mode<synchronous>, transform_indices = @transform_8, window_bounds = array<i64: 1, 32>}, {pipeline_mode = #tpu.pipeline_mode<synchronous>, transform_indices = @transform_9, window_bounds = array<i64: 1, 32>}, {pipeline_mode = #tpu.pipeline_mode<synchronous>, transform_indices = @transform_10, window_bounds = array<i64: 32, 64>}, {pipeline_mode = #tpu.pipeline_mode<synchronous>, transform_indices = @transform_11, window_bounds = array<i64: 1, 64>}, {pipeline_mode = #tpu.pipeline_mode<synchronous>, transform_indices = @transform_12, window_bounds = array<i64: 8, 64>}, {pipeline_mode = #tpu.pipeline_mode<synchronous>, transform_indices = @transform_13, window_bounds = array<i64: 1, 64>}, {pipeline_mode = #tpu.pipeline_mode<synchronous>, transform_indices = @transform_14, window_bounds = array<i64: 2, 16>}]} {
    %c0 = arith.constant 0 : index
    %c0_0 = arith.constant 0 : index
    %c0_1 = arith.constant 0 : index
    %0 = vector.load %arg1[%c0, %c0_0, %c0_1] : memref<2x16x32xf32, #tpu.memory_space<vmem>>, vector<2x16x32xf32>
    %c0_2 = arith.constant 0 : index
    %c0_3 = arith.constant 0 : index
    %1 = vector.load %arg3[%c0_2, %c0_3] : memref<32x32xbf16, #tpu.memory_space<vmem>>, vector<32x32xbf16>
    %2 = vector.shape_cast %0 : vector<2x16x32xf32> to vector<32x32xf32>
    %3 = arith.truncf %2 : vector<32x32xf32> to vector<32x32xbf16>
    %cst = arith.constant dense<0.000000e+00> : vector<32x32xf32>
    %4 = tpu.matmul %3, %1, %cst {dimension_numbers = #tpu.dot_dimension_numbers<[1], [0], [0], [1], [0, 0, 1, 1], [], []>} : vector<32x32xbf16>, vector<32x32xbf16>, vector<32x32xf32> -> vector<32x32xf32>
    %5 = vector.shape_cast %4 : vector<32x32xf32> to vector<2x16x32xf32>
    %c0_4 = arith.constant 0 : index
    %c0_5 = arith.constant 0 : index
    %6 = vector.load %arg4[%c0_4, %c0_5] : memref<1x32xf32, #tpu.memory_space<vmem>>, vector<1x32xf32>
    %7 = vector.shape_cast %6 : vector<1x32xf32> to vector<1x1x32xf32>
    %8 = vector.broadcast %7 : vector<1x1x32xf32> to vector<2x16x32xf32>
    %9 = arith.addf %5, %8 : vector<2x16x32xf32>
    %c0_6 = arith.constant 0 : index
    %c0_7 = arith.constant 0 : index
    %10 = vector.load %arg5[%c0_6, %c0_7] : memref<1x32xf32, #tpu.memory_space<vmem>>, vector<1x32xf32>
    %c0_8 = arith.constant 0 : index
    %c0_9 = arith.constant 0 : index
    %11 = vector.load %arg6[%c0_8, %c0_9] : memref<1x32xf32, #tpu.memory_space<vmem>>, vector<1x32xf32>
    %12 = vector.shape_cast %9 : vector<2x16x32xf32> to vector<1x32x32xf32>
    %cst_10 = arith.constant dense<0.000000e+00> : vector<1x32xf32>
    %13 = vector.multi_reduction <add>, %12, %cst_10 [1] : vector<1x32x32xf32> to vector<1x32xf32>
    %14 = vector.shape_cast %13 : vector<1x32xf32> to vector<1x1x32xf32>
    %cst_11 = arith.constant 3.200000e+01 : f32
    %15 = vector.broadcast %cst_11 : f32 to vector<1x1x32xf32>
    %16 = arith.divf %14, %15 : vector<1x1x32xf32>
    %17 = arith.mulf %12, %12 : vector<1x32x32xf32>
    %cst_12 = arith.constant dense<0.000000e+00> : vector<1x32xf32>
    %18 = vector.multi_reduction <add>, %17, %cst_12 [1] : vector<1x32x32xf32> to vector<1x32xf32>
    %19 = vector.shape_cast %18 : vector<1x32xf32> to vector<1x1x32xf32>
    %cst_13 = arith.constant 3.200000e+01 : f32
    %20 = vector.broadcast %cst_13 : f32 to vector<1x1x32xf32>
    %21 = arith.divf %19, %20 : vector<1x1x32xf32>
    %22 = arith.mulf %16, %16 : vector<1x1x32xf32>
    %23 = arith.subf %21, %22 : vector<1x1x32xf32>
    %24 = vector.broadcast %16 : vector<1x1x32xf32> to vector<1x32x32xf32>
    %25 = arith.subf %12, %24 : vector<1x32x32xf32>
    %cst_14 = arith.constant 9.99999974E-6 : f32
    %26 = vector.broadcast %cst_14 : f32 to vector<1x1x32xf32>
    %27 = arith.addf %23, %26 : vector<1x1x32xf32>
    %28 = math.rsqrt %27 : vector<1x1x32xf32>
    %29 = vector.broadcast %28 : vector<1x1x32xf32> to vector<1x32x32xf32>
    %30 = arith.mulf %25, %29 : vector<1x32x32xf32>
    %31 = vector.shape_cast %30 : vector<1x32x32xf32> to vector<2x16x32xf32>
    %32 = vector.shape_cast %10 : vector<1x32xf32> to vector<1x1x32xf32>
    %33 = vector.broadcast %32 : vector<1x1x32xf32> to vector<2x16x32xf32>
    %34 = arith.mulf %31, %33 : vector<2x16x32xf32>
    %35 = vector.shape_cast %11 : vector<1x32xf32> to vector<1x1x32xf32>
    %36 = vector.broadcast %35 : vector<1x1x32xf32> to vector<2x16x32xf32>
    %37 = arith.addf %34, %36 : vector<2x16x32xf32>
    %cst_15 = arith.constant 0.000000e+00 : f32
    %38 = vector.broadcast %cst_15 : f32 to vector<2x16x32xf32>
    %39 = arith.cmpf oge, %37, %38 : vector<2x16x32xf32>
    %cst_16 = arith.constant 2.000000e-01 : f32
    %40 = vector.broadcast %cst_16 : f32 to vector<2x16x32xf32>
    %41 = arith.mulf %40, %37 : vector<2x16x32xf32>
    %42 = arith.select %39, %37, %41 : vector<2x16x32xi1>, vector<2x16x32xf32>
    %c4_i32 = arith.constant 4 : i32
    %43 = tpu.dynamic_rotate %42 by %c4_i32 dim 1 : vector<2x16x32xf32>, i32 -> vector<2x16x32xf32>
    %c3_i32 = arith.constant 3 : i32
    %44 = tpu.dynamic_rotate %42 by %c3_i32 dim 1 : vector<2x16x32xf32>, i32 -> vector<2x16x32xf32>
    %c2_i32 = arith.constant 2 : i32
    %45 = tpu.dynamic_rotate %42 by %c2_i32 dim 1 : vector<2x16x32xf32>, i32 -> vector<2x16x32xf32>
    %c1_i32 = arith.constant 1 : i32
    %46 = tpu.dynamic_rotate %42 by %c1_i32 dim 1 : vector<2x16x32xf32>, i32 -> vector<2x16x32xf32>
    %c15_i32 = arith.constant 15 : i32
    %47 = tpu.dynamic_rotate %42 by %c15_i32 dim 1 : vector<2x16x32xf32>, i32 -> vector<2x16x32xf32>
    %c14_i32 = arith.constant 14 : i32
    %48 = tpu.dynamic_rotate %42 by %c14_i32 dim 1 : vector<2x16x32xf32>, i32 -> vector<2x16x32xf32>
    %c13_i32 = arith.constant 13 : i32
    %49 = tpu.dynamic_rotate %42 by %c13_i32 dim 1 : vector<2x16x32xf32>, i32 -> vector<2x16x32xf32>
    %c12_i32 = arith.constant 12 : i32
    %50 = tpu.dynamic_rotate %42 by %c12_i32 dim 1 : vector<2x16x32xf32>, i32 -> vector<2x16x32xf32>
    %51 = tpu.concatenate %43, %44, %45, %46, %42, %47, %48, %49, %50 in 2 : vector<2x16x32xf32>, vector<2x16x32xf32>, vector<2x16x32xf32>, vector<2x16x32xf32>, vector<2x16x32xf32>, vector<2x16x32xf32>, vector<2x16x32xf32>, vector<2x16x32xf32>, vector<2x16x32xf32> -> vector<2x16x288xf32>
    %c0_17 = arith.constant 0 : index
    %c0_18 = arith.constant 0 : index
    %52 = vector.load %arg7[%c0_17, %c0_18] : memref<288x32xbf16, #tpu.memory_space<vmem>>, vector<288x32xbf16>
    %53 = vector.shape_cast %51 : vector<2x16x288xf32> to vector<32x288xf32>
    %54 = arith.truncf %53 : vector<32x288xf32> to vector<32x288xbf16>
    %cst_19 = arith.constant dense<0.000000e+00> : vector<32x32xf32>
    %55 = tpu.matmul %54, %52, %cst_19 {dimension_numbers = #tpu.dot_dimension_numbers<[1], [0], [0], [1], [0, 0, 1, 1], [], []>} : vector<32x288xbf16>, vector<288x32xbf16>, vector<32x32xf32> -> vector<32x32xf32>
    %56 = vector.shape_cast %55 : vector<32x32xf32> to vector<2x16x32xf32>
    %c0_20 = arith.constant 0 : index
    %c0_21 = arith.constant 0 : index
    %57 = vector.load %arg8[%c0_20, %c0_21] : memref<1x32xf32, #tpu.memory_space<vmem>>, vector<1x32xf32>
    %58 = vector.shape_cast %57 : vector<1x32xf32> to vector<1x1x32xf32>
    %59 = vector.broadcast %58 : vector<1x1x32xf32> to vector<2x16x32xf32>
    %60 = arith.addf %56, %59 : vector<2x16x32xf32>
    %c0_22 = arith.constant 0 : index
    %c0_23 = arith.constant 0 : index
    %61 = vector.load %arg9[%c0_22, %c0_23] : memref<1x32xf32, #tpu.memory_space<vmem>>, vector<1x32xf32>
    %c0_24 = arith.constant 0 : index
    %c0_25 = arith.constant 0 : index
    %62 = vector.load %arg10[%c0_24, %c0_25] : memref<1x32xf32, #tpu.memory_space<vmem>>, vector<1x32xf32>
    %63 = vector.shape_cast %60 : vector<2x16x32xf32> to vector<1x32x32xf32>
    %cst_26 = arith.constant dense<0.000000e+00> : vector<1x32xf32>
    %64 = vector.multi_reduction <add>, %63, %cst_26 [1] : vector<1x32x32xf32> to vector<1x32xf32>
    %65 = vector.shape_cast %64 : vector<1x32xf32> to vector<1x1x32xf32>
    %cst_27 = arith.constant 3.200000e+01 : f32
    %66 = vector.broadcast %cst_27 : f32 to vector<1x1x32xf32>
    %67 = arith.divf %65, %66 : vector<1x1x32xf32>
    %68 = arith.mulf %63, %63 : vector<1x32x32xf32>
    %cst_28 = arith.constant dense<0.000000e+00> : vector<1x32xf32>
    %69 = vector.multi_reduction <add>, %68, %cst_28 [1] : vector<1x32x32xf32> to vector<1x32xf32>
    %70 = vector.shape_cast %69 : vector<1x32xf32> to vector<1x1x32xf32>
    %cst_29 = arith.constant 3.200000e+01 : f32
    %71 = vector.broadcast %cst_29 : f32 to vector<1x1x32xf32>
    %72 = arith.divf %70, %71 : vector<1x1x32xf32>
    %73 = arith.mulf %67, %67 : vector<1x1x32xf32>
    %74 = arith.subf %72, %73 : vector<1x1x32xf32>
    %75 = vector.broadcast %67 : vector<1x1x32xf32> to vector<1x32x32xf32>
    %76 = arith.subf %63, %75 : vector<1x32x32xf32>
    %cst_30 = arith.constant 9.99999974E-6 : f32
    %77 = vector.broadcast %cst_30 : f32 to vector<1x1x32xf32>
    %78 = arith.addf %74, %77 : vector<1x1x32xf32>
    %79 = math.rsqrt %78 : vector<1x1x32xf32>
    %80 = vector.broadcast %79 : vector<1x1x32xf32> to vector<1x32x32xf32>
    %81 = arith.mulf %76, %80 : vector<1x32x32xf32>
    %82 = vector.shape_cast %81 : vector<1x32x32xf32> to vector<2x16x32xf32>
    %83 = vector.shape_cast %61 : vector<1x32xf32> to vector<1x1x32xf32>
    %84 = vector.broadcast %83 : vector<1x1x32xf32> to vector<2x16x32xf32>
    %85 = arith.mulf %82, %84 : vector<2x16x32xf32>
    %86 = vector.shape_cast %62 : vector<1x32xf32> to vector<1x1x32xf32>
    %87 = vector.broadcast %86 : vector<1x1x32xf32> to vector<2x16x32xf32>
    %88 = arith.addf %85, %87 : vector<2x16x32xf32>
    %cst_31 = arith.constant 0.000000e+00 : f32
    %89 = vector.broadcast %cst_31 : f32 to vector<2x16x32xf32>
    %90 = arith.cmpf oge, %88, %89 : vector<2x16x32xf32>
    %cst_32 = arith.constant 2.000000e-01 : f32
    %91 = vector.broadcast %cst_32 : f32 to vector<2x16x32xf32>
    %92 = arith.mulf %91, %88 : vector<2x16x32xf32>
    %93 = arith.select %90, %88, %92 : vector<2x16x32xi1>, vector<2x16x32xf32>
    %94 = arith.addf %93, %42 : vector<2x16x32xf32>
    %cst_33 = arith.constant 0.707106769 : f32
    %95 = vector.broadcast %cst_33 : f32 to vector<2x16x32xf32>
    %96 = arith.mulf %94, %95 : vector<2x16x32xf32>
    %c0_34 = arith.constant 0 : index
    %c0_35 = arith.constant 0 : index
    %97 = vector.load %arg11[%c0_34, %c0_35] : memref<32x64xbf16, #tpu.memory_space<vmem>>, vector<32x64xbf16>
    %98 = vector.shape_cast %96 : vector<2x16x32xf32> to vector<32x32xf32>
    %99 = arith.truncf %98 : vector<32x32xf32> to vector<32x32xbf16>
    %cst_36 = arith.constant dense<0.000000e+00> : vector<32x64xf32>
    %100 = tpu.matmul %99, %97, %cst_36 {dimension_numbers = #tpu.dot_dimension_numbers<[1], [0], [0], [1], [0, 0, 1, 1], [], []>} : vector<32x32xbf16>, vector<32x64xbf16>, vector<32x64xf32> -> vector<32x64xf32>
    %101 = vector.shape_cast %100 : vector<32x64xf32> to vector<2x16x64xf32>
    %c0_37 = arith.constant 0 : index
    %c0_38 = arith.constant 0 : index
    %102 = vector.load %arg12[%c0_37, %c0_38] : memref<1x64xf32, #tpu.memory_space<vmem>>, vector<1x64xf32>
    %103 = vector.shape_cast %102 : vector<1x64xf32> to vector<1x1x64xf32>
    %104 = vector.broadcast %103 : vector<1x1x64xf32> to vector<2x16x64xf32>
    %105 = arith.addf %101, %104 : vector<2x16x64xf32>
    %c0_39 = arith.constant 0 : index
    %c0_40 = arith.constant 0 : index
    %106 = vector.load %arg2[%c0_39, %c0_40] : memref<2x8xf32, #tpu.memory_space<vmem>>, vector<2x8xf32>
    %c0_41 = arith.constant 0 : index
    %c0_42 = arith.constant 0 : index
    %107 = vector.load %arg13[%c0_41, %c0_42] : memref<8x64xbf16, #tpu.memory_space<vmem>>, vector<8x64xbf16>
    %108 = arith.truncf %106 : vector<2x8xf32> to vector<2x8xbf16>
    %cst_43 = arith.constant dense<0.000000e+00> : vector<2x64xf32>
    %109 = tpu.matmul %108, %107, %cst_43 {dimension_numbers = #tpu.dot_dimension_numbers<[1], [0], [0], [1], [0, 0, 1, 1], [], []>} : vector<2x8xbf16>, vector<8x64xbf16>, vector<2x64xf32> -> vector<2x64xf32>
    %c0_44 = arith.constant 0 : index
    %c0_45 = arith.constant 0 : index
    %110 = vector.load %arg14[%c0_44, %c0_45] : memref<1x64xf32, #tpu.memory_space<vmem>>, vector<1x64xf32>
    %111 = vector.broadcast %110 : vector<1x64xf32> to vector<2x64xf32>
    %112 = arith.addf %109, %111 : vector<2x64xf32>
    %113 = vector.shape_cast %112 : vector<2x64xf32> to vector<2x1x64xf32>
    %114 = vector.broadcast %113 : vector<2x1x64xf32> to vector<2x16x64xf32>
    %115 = arith.mulf %105, %114 : vector<2x16x64xf32>
    %cst_46 = arith.constant dense<0.000000e+00> : vector<2x16xf32>
    %116 = vector.multi_reduction <add>, %115, %cst_46 [2] : vector<2x16x64xf32> to vector<2x16xf32>
    %cst_47 = arith.constant 1.250000e-01 : f32
    %117 = vector.broadcast %cst_47 : f32 to vector<2x16xf32>
    %118 = arith.mulf %116, %117 : vector<2x16xf32>
    %c0_48 = arith.constant 0 : index
    %c0_49 = arith.constant 0 : index
    %119 = vector.load %arg15[%c0_48, %c0_49] : memref<2x16xf32, #tpu.memory_space<vmem>>, vector<2x16xf32>
    tpu.vector_store %arg15[%c0_48, %c0_49], %118 {strides = array<i32>} : memref<2x16xf32, #tpu.memory_space<vmem>>, vector<2x16xf32>,
    return
  }
  func.func @transform_0(%arg0: i32) -> (i32, i32, i32) {
    %c0_i32 = arith.constant 0 : i32
    %c0_i32_0 = arith.constant 0 : i32
    %c0_i32_1 = arith.constant 0 : i32
    %c0_i32_2 = arith.constant 0 : i32
    return %c0_i32, %c0_i32_0, %c0_i32_1 : i32, i32, i32
  }
  func.func @transform_1(%arg0: i32) -> (i32, i32) {
    %c0_i32 = arith.constant 0 : i32
    %c0_i32_0 = arith.constant 0 : i32
    %c0_i32_1 = arith.constant 0 : i32
    return %c0_i32, %c0_i32_0 : i32, i32
  }
  func.func @transform_2(%arg0: i32) -> (i32, i32) {
    %c0_i32 = arith.constant 0 : i32
    %c0_i32_0 = arith.constant 0 : i32
    %c0_i32_1 = arith.constant 0 : i32
    return %c0_i32, %c0_i32_0 : i32, i32
  }
  func.func @transform_3(%arg0: i32) -> (i32, i32) {
    %c0_i32 = arith.constant 0 : i32
    %c0_i32_0 = arith.constant 0 : i32
    %c0_i32_1 = arith.constant 0 : i32
    return %c0_i32, %c0_i32_0 : i32, i32
  }
  func.func @transform_4(%arg0: i32) -> (i32, i32) {
    %c0_i32 = arith.constant 0 : i32
    %c0_i32_0 = arith.constant 0 : i32
    %c0_i32_1 = arith.constant 0 : i32
    return %c0_i32, %c0_i32_0 : i32, i32
  }
  func.func @transform_5(%arg0: i32) -> (i32, i32) {
    %c0_i32 = arith.constant 0 : i32
    %c0_i32_0 = arith.constant 0 : i32
    %c0_i32_1 = arith.constant 0 : i32
    return %c0_i32, %c0_i32_0 : i32, i32
  }
  func.func @transform_6(%arg0: i32) -> (i32, i32) {
    %c0_i32 = arith.constant 0 : i32
    %c0_i32_0 = arith.constant 0 : i32
    %c0_i32_1 = arith.constant 0 : i32
    return %c0_i32, %c0_i32_0 : i32, i32
  }
  func.func @transform_7(%arg0: i32) -> (i32, i32) {
    %c0_i32 = arith.constant 0 : i32
    %c0_i32_0 = arith.constant 0 : i32
    %c0_i32_1 = arith.constant 0 : i32
    return %c0_i32, %c0_i32_0 : i32, i32
  }
  func.func @transform_8(%arg0: i32) -> (i32, i32) {
    %c0_i32 = arith.constant 0 : i32
    %c0_i32_0 = arith.constant 0 : i32
    %c0_i32_1 = arith.constant 0 : i32
    return %c0_i32, %c0_i32_0 : i32, i32
  }
  func.func @transform_9(%arg0: i32) -> (i32, i32) {
    %c0_i32 = arith.constant 0 : i32
    %c0_i32_0 = arith.constant 0 : i32
    %c0_i32_1 = arith.constant 0 : i32
    return %c0_i32, %c0_i32_0 : i32, i32
  }
  func.func @transform_10(%arg0: i32) -> (i32, i32) {
    %c0_i32 = arith.constant 0 : i32
    %c0_i32_0 = arith.constant 0 : i32
    %c0_i32_1 = arith.constant 0 : i32
    return %c0_i32, %c0_i32_0 : i32, i32
  }
  func.func @transform_11(%arg0: i32) -> (i32, i32) {
    %c0_i32 = arith.constant 0 : i32
    %c0_i32_0 = arith.constant 0 : i32
    %c0_i32_1 = arith.constant 0 : i32
    return %c0_i32, %c0_i32_0 : i32, i32
  }
  func.func @transform_12(%arg0: i32) -> (i32, i32) {
    %c0_i32 = arith.constant 0 : i32
    %c0_i32_0 = arith.constant 0 : i32
    %c0_i32_1 = arith.constant 0 : i32
    return %c0_i32, %c0_i32_0 : i32, i32
  }
  func.func @transform_13(%arg0: i32) -> (i32, i32) {
    %c0_i32 = arith.constant 0 : i32
    %c0_i32_0 = arith.constant 0 : i32
    %c0_i32_1 = arith.constant 0 : i32
    return %c0_i32, %c0_i32_0 : i32, i32
  }
  func.func @transform_14(%arg0: i32) -> (i32, i32) {
    %c0_i32 = arith.constant 0 : i32
    %c0_i32_0 = arith.constant 0 : i32
    %c0_i32_1 = arith.constant 0 : i32
    return %c0_i32, %c0_i32_0 : i32, i32
  }
}

</mosaic_0001>

<llo_original>
// kernel: tpu_custom_call.1
$region0: #{tpu_custom_call.1}
  #allocation0 [shape = 'u32[]', space=smem, size = 0x4, offset = 0x4, fixed_abs, tag = 'smem constant byte address 0x4 - core index']
  #allocation1 [shape = 'u32[144,128]{1,0:T(1,128)}', space=vmem, size = 0x12000, scoped, tag = 'internal scratch']
  %s0 = inlined_call_operand.vmem [shape: f32[2,16,32], index: 0, kind: input, shape index: {}]
  %s1 = inlined_call_operand.vmem [shape: f32[2,8], index: 1, kind: input, shape index: {}]
  %s2 = inlined_call_operand.vmem [shape: bf16[32,32], index: 2, kind: input, shape index: {}]
  %s3 = inlined_call_operand.vmem [shape: f32[1,32], index: 3, kind: input, shape index: {}]
  %s4 = inlined_call_operand.vmem [shape: f32[1,32], index: 4, kind: input, shape index: {}]
  %s5 = inlined_call_operand.vmem [shape: f32[1,32], index: 5, kind: input, shape index: {}]
  %s6 = inlined_call_operand.vmem [shape: bf16[288,32], index: 6, kind: input, shape index: {}]
  %s7 = inlined_call_operand.vmem [shape: f32[1,32], index: 7, kind: input, shape index: {}]
  %s8 = inlined_call_operand.vmem [shape: f32[1,32], index: 8, kind: input, shape index: {}]
  %s9 = inlined_call_operand.vmem [shape: f32[1,32], index: 9, kind: input, shape index: {}]
  %s10 = inlined_call_operand.vmem [shape: bf16[32,64], index: 10, kind: input, shape index: {}]
  %s11 = inlined_call_operand.vmem [shape: f32[1,64], index: 11, kind: input, shape index: {}]
  %s12 = inlined_call_operand.vmem [shape: bf16[8,64], index: 12, kind: input, shape index: {}]
  %s13 = inlined_call_operand.vmem [shape: f32[1,64], index: 13, kind: input, shape index: {}]
  %s14 = inlined_call_operand.hbm [shape: f32[2,16], index: 14, kind: output, shape index: {}]
  %s15 = sld [smem:[#allocation0]]
  $region66: #{tpu_custom_call.1} parent=0
    _
  %s17 = ssub.s32 1, %s15
  %s18 = scalar_select 0, %s17, %s15
  $region1: #{tpu_custom_call.1} parent=0
    #allocation2 [shape = 'u8[1024]{0}', space=vmem, size = 0x400, scoped, tag = 'output window, operand 0, single buffered']
    #allocation3 [shape = 's32[1]{0}', space=sflag, size = 0x4, scoped, tag = 'scoped memory for tpu_custom_call.1']
    %19 = vsyncpa [#allocation3], 0
    // Predicated region
    $region2: #{tpu_custom_call.1} parent=1 // pred_check
      _
    $region3: #{tpu_custom_call.1} parent=1 // pred_check_branch
      %21 = sbr.rel (0) target = $region5
    $region4: #{tpu_custom_call.1} parent=1 // pred_region
      _
    $region5: #{tpu_custom_call.1} parent=1 // pred_fallthru
      _
    // Predicated region
    $region6: #{tpu_custom_call.1} parent=1 // pred_check
      _
    $region7: #{tpu_custom_call.1} parent=1 // pred_check_branch
      %23 = sbr.rel (0) target = $region9
    $region8: #{tpu_custom_call.1} parent=1 // pred_region
      _
    $region9: #{tpu_custom_call.1} parent=1 // pred_fallthru
      _
    // Predicated region
    $region10: #{tpu_custom_call.1} parent=1 // pred_check
      _
    $region11: #{tpu_custom_call.1} parent=1 // pred_check_branch
      %25 = sbr.rel (0) target = $region13
    $region12: #{tpu_custom_call.1} parent=1 // pred_region
      _
    $region13: #{tpu_custom_call.1} parent=1 // pred_fallthru
      _
    // Predicated region
    $region14: #{tpu_custom_call.1} parent=1 // pred_check
      _
    $region15: #{tpu_custom_call.1} parent=1 // pred_check_branch
      %27 = sbr.rel (0) target = $region17
    $region16: #{tpu_custom_call.1} parent=1 // pred_region
      _
    $region17: #{tpu_custom_call.1} parent=1 // pred_fallthru
      _
    // Predicated region
    $region18: #{tpu_custom_call.1} parent=1 // pred_check
      _
    $region19: #{tpu_custom_call.1} parent=1 // pred_check_branch
      %29 = sbr.rel (0) target = $region21
    $region20: #{tpu_custom_call.1} parent=1 // pred_region
      _
    $region21: #{tpu_custom_call.1} parent=1 // pred_fallthru
      _
    // Predicated region
    $region22: #{tpu_custom_call.1} parent=1 // pred_check
      _
    $region23: #{tpu_custom_call.1} parent=1 // pred_check_branch
      %31 = sbr.rel (0) target = $region25
    $region24: #{tpu_custom_call.1} parent=1 // pred_region
      _
    $region25: #{tpu_custom_call.1} parent=1 // pred_fallthru
      _
    // Predicated region
    $region26: #{tpu_custom_call.1} parent=1 // pred_check
      _
    $region27: #{tpu_custom_call.1} parent=1 // pred_check_branch
      %33 = sbr.rel (0) target = $region29
    $region28: #{tpu_custom_call.1} parent=1 // pred_region
      _
    $region29: #{tpu_custom_call.1} parent=1 // pred_fallthru
      _
    // Predicated region
    $region30: #{tpu_custom_call.1} parent=1 // pred_check
      _
    $region31: #{tpu_custom_call.1} parent=1 // pred_check_branch
      %35 = sbr.rel (0) target = $region33
    $region32: #{tpu_custom_call.1} parent=1 // pred_region
      _
    $region33: #{tpu_custom_call.1} parent=1 // pred_fallthru
      _
    // Predicated region
    $region34: #{tpu_custom_call.1} parent=1 // pred_check
      _
    $region35: #{tpu_custom_call.1} parent=1 // pred_check_branch
      %37 = sbr.rel (0) target = $region37
    $region36: #{tpu_custom_call.1} parent=1 // pred_region
      _
    $region37: #{tpu_custom_call.1} parent=1 // pred_fallthru
      _
    // Predicated region
    $region38: #{tpu_custom_call.1} parent=1 // pred_check
      _
    $region39: #{tpu_custom_call.1} parent=1 // pred_check_branch
      %39 = sbr.rel (0) target = $region41
    $region40: #{tpu_custom_call.1} parent=1 // pred_region
      _
    $region41: #{tpu_custom_call.1} parent=1 // pred_fallthru
      _
    // Predicated region
    $region42: #{tpu_custom_call.1} parent=1 // pred_check
      _
    $region43: #{tpu_custom_call.1} parent=1 // pred_check_branch
      %41 = sbr.rel (0) target = $region45
    $region44: #{tpu_custom_call.1} parent=1 // pred_region
      _
    $region45: #{tpu_custom_call.1} parent=1 // pred_fallthru
      _
    // Predicated region
    $region46: #{tpu_custom_call.1} parent=1 // pred_check
      _
    $region47: #{tpu_custom_call.1} parent=1 // pred_check_branch
      %43 = sbr.rel (0) target = $region49
    $region48: #{tpu_custom_call.1} parent=1 // pred_region
      _
    $region49: #{tpu_custom_call.1} parent=1 // pred_fallthru
      _
    // Predicated region
    $region50: #{tpu_custom_call.1} parent=1 // pred_check
      _
    $region51: #{tpu_custom_call.1} parent=1 // pred_check_branch
      %45 = sbr.rel (0) target = $region53
    $region52: #{tpu_custom_call.1} parent=1 // pred_region
      _
    $region53: #{tpu_custom_call.1} parent=1 // pred_fallthru
      _
    // Predicated region
    $region54: #{tpu_custom_call.1} parent=1 // pred_check
      _
    $region55: #{tpu_custom_call.1} parent=1 // pred_check_branch
      %47 = sbr.rel (0) target = $region57
    $region56: #{tpu_custom_call.1} parent=1 // pred_region
      _
    $region57: #{tpu_custom_call.1} parent=1 // pred_fallthru
      _
    %v49 = vld [vmem:[%s0] sm:$0xff]
    %v50 = vld [vmem:[%s0 + $0x8] sm:$0xff]
    %v51 = vld [vmem:[%s0 + $0x10] sm:$0xff]
    %v52 = vld [vmem:[%s0 + $0x18] sm:$0xff]
    %v53 = vld [vmem:[%s2] sm:$0xf]
    %v54 = vld [vmem:[%s2 + $0x4] sm:$0xf]
    %v55 = vld [vmem:[%s2 + $0x8] sm:$0xf]
    %v56 = vld [vmem:[%s2 + $0xc] sm:$0xf]
    %v57 = vpack.c.bf16 %v50, %v49
    %v58 = vpack.c.bf16 %v52, %v51
    %v63 = vunpack.c.l.b16 %v53
    %v64 = vunpack.c.l.b16 %v54
    %v65 = vunpack.c.l.b16 %v55
    %v66 = vunpack.c.l.b16 %v56
    %v67 = vpack.c.b16 %v64, %v63
    %v68 = vpack.c.b16 %v66, %v65
    %vm71 = vcmask 261120
    %v73 = vsel %vm71, %v57, 0
    %v76 = vsel %vm71, %v58, 0
    %78 = vmatprep.subr.bf16.mxu0 0
    %79 = vmatpush1.bf16.msra.mxu0 %v67
    %80 = vmatprep.subr.bf16.mxu0 0
    %81 = vmatpush1.bf16.msra.mxu0 %v68
    %82 = vmatprep.subr.bf16.mxu0 0
    %83 = vmatpush1.bf16.msra.mxu0 0
    %84 = vmatprep.subr.bf16.mxu0 0
    %85 = vmatpush1.bf16.msra.mxu0 0
    %86 = vmatprep.subr.bf16.mxu0 0
    %87 = vmatpush1.bf16.msra.mxu0 0
    %88 = vmatprep.subr.bf16.mxu0 0
    %89 = vmatpush1.bf16.msra.mxu0 0
    %90 = vmatprep.subr.bf16.mxu0 0
    %91 = vmatpush1.bf16.msra.mxu0 0
    %92 = vmatprep.subr.bf16.mxu0 0
    %93 = vmatpush1.bf16.msra.mxu0 0
    %94 = vmatprep.subr.bf16.mxu0 0
    %95 = vmatpush1.bf16.msra.mxu0 0
    %96 = vmatprep.subr.bf16.mxu0 0
    %97 = vmatpush1.bf16.msra.mxu0 0
    %98 = vmatprep.subr.bf16.mxu0 0
    %99 = vmatpush1.bf16.msra.mxu0 0
    %100 = vmatprep.subr.bf16.mxu0 0
    %101 = vmatpush1.bf16.msra.mxu0 0
    %102 = vmatprep.subr.bf16.mxu0 0
    %103 = vmatpush1.bf16.msra.mxu0 0
    %104 = vmatprep.subr.bf16.mxu0 0
    %105 = vmatpush1.bf16.msra.mxu0 0
    %106 = vmatprep.subr.bf16.mxu0 0
    %107 = vmatpush1.bf16.msra.mxu0 0
    %108 = vmatprep.subr.bf16.mxu0 0
    %109 = vmatpush1.bf16.msra.mxu0 0
    %110 = vmatprep.mubr.bf16.mxu0 0
    %111 = vmatmul.mubr.bf16.gmra.mrb[0].mxu0 %v73
    %v112 = vpop.f32.mrb[0].mxu0
    %v113 = vadd.f32 0.0, %v112
    %v114 = vpop.f32.mrb[0].mxu0
    %v115 = vpop.f32.mrb[0].mxu0
    %v116 = vadd.f32 0.0, %v115
    %v117 = vpop.f32.mrb[0].mxu0
    %118 = vmatprep.mubr.bf16.mxu0 0
    %119 = vmatmul.mubr.bf16.gmra.mrb[0].mxu0 %v76
    %v120 = vpop.f32.mrb[0].mxu0
    %v121 = vadd.f32 0.0, %v120
    %v122 = vpop.f32.mrb[0].mxu0
    %v123 = vpop.f32.mrb[0].mxu0
    %v124 = vadd.f32 0.0, %v123
    %v125 = vpop.f32.mrb[0].mxu0
    %126 = vdwg.mxu0
    %v127 = vld [vmem:[%s3] sm:$0x1]
    %v129 = vlaneseq
    %v130 = vshrl.u32 %v129, 7
    %v131 = vsub.s32 0, %v130
    %v132 = vrot.slane %v127, %v131
    %v134 = vadd.f32 %v113, %v132
    %v135 = vadd.f32 %v116, %v132
    %v136 = vadd.f32 %v121, %v132
    %v137 = vadd.f32 %v124, %v132
    %v138 = vld [vmem:[%s4] sm:$0x1]
    %v139 = vld [vmem:[%s5] sm:$0x1]
    %v140 = vsel %vm71, %v134, 0.0
    %v141 = vsel %vm71, %v135, 0.0
    %v142 = vadd.f32 %v140, %v141
    %v143 = vsel %vm71, %v136, 0.0
    %v144 = vadd.f32 %v142, %v143
    %v145 = vsel %vm71, %v137, 0.0
    %v146 = vadd.f32 %v144, %v145
    %v147 = vrot.slane %v146, 4
    %v148 = vadd.f32 %v146, %v147
    %v149 = vrot.slane %v148, 2
    %v150 = vadd.f32 %v148, %v149
    %v151 = vrot.slane %v150, 1
    %v152 = vadd.f32 %v150, %v151
    %v153 = vrcp.pop 32.0
    %v154 = vmul.f32 %v152, %v153
    %v155 = vmul.f32 %v134, %v134
    %v156 = vmul.f32 %v135, %v135
    %v157 = vmul.f32 %v136, %v136
    %v158 = vmul.f32 %v137, %v137
    %v159 = vsel %vm71, %v155, 0.0
    %v160 = vsel %vm71, %v156, 0.0
    %v161 = vadd.f32 %v159, %v160
    %v162 = vsel %vm71, %v157, 0.0
    %v163 = vadd.f32 %v161, %v162
    %v164 = vsel %vm71, %v158, 0.0
    %v165 = vadd.f32 %v163, %v164
    %v166 = vrot.slane %v165, 4
    %v167 = vadd.f32 %v165, %v166
    %v168 = vrot.slane %v167, 2
    %v169 = vadd.f32 %v167, %v168
    %v170 = vrot.slane %v169, 1
    %v171 = vadd.f32 %v169, %v170
    %v172 = vmul.f32 %v171, %v153
    %v173 = vmul.f32 %v154, %v154
    %v174 = vsub.f32 %v172, %v173
    %v175 = vsub.f32 %v134, %v154
    %v176 = vsub.f32 %v135, %v154
    %v177 = vsub.f32 %v136, %v154
    %v178 = vsub.f32 %v137, %v154
    %v179 = vadd.f32 %v174, 1e-05
    %v180 = vrsqrt.pop %v179
    %v181 = vmul.f32 %v175, %v180
    %v182 = vmul.f32 %v176, %v180
    %v183 = vmul.f32 %v177, %v180
    %v184 = vmul.f32 %v178, %v180
    %v186 = vlaneseq
    %v187 = vshrl.u32 %v186, 7
    %v188 = vsub.s32 0, %v187
    %v189 = vrot.slane %v138, %v188
    %v191 = vmul.f32 %v181, %v189
    %v192 = vmul.f32 %v182, %v189
    %v193 = vmul.f32 %v183, %v189
    %v194 = vmul.f32 %v184, %v189
    %v196 = vlaneseq
    %v197 = vshrl.u32 %v196, 7
    %v198 = vsub.s32 0, %v197
    %v199 = vrot.slane %v139, %v198
    %v201 = vadd.f32 %v191, %v199
    %v202 = vadd.f32 %v192, %v199
    %v203 = vadd.f32 %v193, %v199
    %v204 = vadd.f32 %v194, %v199
    %vm205 = vcmp.ge.f32.partialorder %v201, 0.0
    %vm206 = vcmp.ge.f32.partialorder %v202, 0.0
    %vm207 = vcmp.ge.f32.partialorder %v203, 0.0
    %vm208 = vcmp.ge.f32.partialorder %v204, 0.0
    %v209 = vmul.f32 %v201, 0.2
    %v210 = vmul.f32 %v202, 0.2
    %v211 = vmul.f32 %v203, 0.2
    %v212 = vmul.f32 %v204, 0.2
    %v213 = vsel %vm205, %v201, %v209
    %v214 = vsel %vm206, %v202, %v210
    %v215 = vsel %vm207, %v203, %v211
    %v216 = vsel %vm208, %v204, %v212
    %v217 = vrot.slane %v213, 4
    %v218 = vrot.slane %v215, 4
    %v219 = vrot.slane %v214, 4
    %v220 = vrot.slane %v216, 4
    %v221 = vlaneseq
    %v222 = vshrl.u32 %v221, 7
    %vm223 = vcmp.lt.s32.totalorder %v222, 4
    %v224 = vsel %vm223, %v217, %v219
    %v225 = vsel %vm223, %v218, %v220
    %v226 = vsel %vm223, %v219, %v217
    %v227 = vsel %vm223, %v220, %v218
    %v228 = vrot.slane %v213, 5
    %v229 = vrot.slane %v215, 5
    %v230 = vrot.slane %v214, 5
    %v231 = vrot.slane %v216, 5
    %vm232 = vcmp.lt.s32.totalorder %v222, 3
    %v233 = vsel %vm232, %v228, %v230
    %v234 = vsel %vm232, %v229, %v231
    %v235 = vsel %vm232, %v230, %v228
    %v236 = vsel %vm232, %v231, %v229
    %v237 = vrot.slane %v213, 6
    %v238 = vrot.slane %v215, 6
    %v239 = vrot.slane %v214, 6
    %v240 = vrot.slane %v216, 6
    %vm241 = vcmp.lt.s32.totalorder %v222, 2
    %v242 = vsel %vm241, %v237, %v239
    %v243 = vsel %vm241, %v238, %v240
    %v244 = vsel %vm241, %v239, %v237
    %v245 = vsel %vm241, %v240, %v238
    %v246 = vrot.slane %v213, 7
    %v247 = vrot.slane %v215, 7
    %v248 = vrot.slane %v214, 7
    %v249 = vrot.slane %v216, 7
    %vm250 = vcmp.lt.s32.totalorder %v222, 1
    %v251 = vsel %vm250, %v246, %v248
    %v252 = vsel %vm250, %v247, %v249
    %v253 = vsel %vm250, %v248, %v246
    %v254 = vsel %vm250, %v249, %v247
    %v255 = vrot.slane %v213, 1
    %v256 = vrot.slane %v215, 1
    %v257 = vrot.slane %v214, 1
    %v258 = vrot.slane %v216, 1
    %vm259 = vcmp.lt.s32.totalorder %v222, 7
    %v260 = vsel %vm259, %v255, %v257
    %v261 = vsel %vm259, %v256, %v258
    %v262 = vsel %vm259, %v257, %v255
    %v263 = vsel %vm259, %v258, %v256
    %v264 = vrot.slane %v213, 2
    %v265 = vrot.slane %v215, 2
    %v266 = vrot.slane %v214, 2
    %v267 = vrot.slane %v216, 2
    %vm268 = vcmp.lt.s32.totalorder %v222, 6
    %v269 = vsel %vm268, %v264, %v266
    %v270 = vsel %vm268, %v265, %v267
    %v271 = vsel %vm268, %v266, %v264
    %v272 = vsel %vm268, %v267, %v265
    %v273 = vrot.slane %v213, 3
    %v274 = vrot.slane %v215, 3
    %v275 = vrot.slane %v214, 3
    %v276 = vrot.slane %v216, 3
    %vm277 = vcmp.lt.s32.totalorder %v222, 5
    %v278 = vsel %vm277, %v273, %v275
    %v279 = vsel %vm277, %v274, %v276
    %v280 = vsel %vm277, %v275, %v273
    %v281 = vsel %vm277, %v276, %v274
    %286 = vrot.lane.b32.xlu0 %v235, 32
    %v287 = vpop.permute.xlu0 %286
    %288 = vrot.lane.b32.xlu0 %v233, 32
    %v289 = vpop.permute.xlu0 %288
    %290 = vrot.lane.b32.xlu0 %v236, 32
    %v291 = vpop.permute.xlu0 %290
    %292 = vrot.lane.b32.xlu0 %v234, 32
    %v293 = vpop.permute.xlu0 %292
    %302 = vrot.lane.b32.xlu0 %v244, 64
    %v303 = vpop.permute.xlu0 %302
    %304 = vrot.lane.b32.xlu0 %v242, 64
    %v305 = vpop.permute.xlu0 %304
    %306 = vrot.lane.b32.xlu0 %v245, 64
    %v307 = vpop.permute.xlu0 %306
    %308 = vrot.lane.b32.xlu0 %v243, 64
    %v309 = vpop.permute.xlu0 %308
    %318 = vrot.lane.b32.xlu0 %v253, 96
    %v319 = vpop.permute.xlu0 %318
    %320 = vrot.lane.b32.xlu0 %v251, 96
    %v321 = vpop.permute.xlu0 %320
    %322 = vrot.lane.b32.xlu0 %v254, 96
    %v323 = vpop.permute.xlu0 %322
    %324 = vrot.lane.b32.xlu0 %v252, 96
    %v325 = vpop.permute.xlu0 %324
    %334 = vrot.lane.b32.xlu0 %v260, 32
    %v335 = vpop.permute.xlu0 %334
    %336 = vrot.lane.b32.xlu0 %v262, 32
    %v337 = vpop.permute.xlu0 %336
    %338 = vrot.lane.b32.xlu0 %v261, 32
    %v339 = vpop.permute.xlu0 %338
    %340 = vrot.lane.b32.xlu0 %v263, 32
    %v341 = vpop.permute.xlu0 %340
    %350 = vrot.lane.b32.xlu0 %v269, 64
    %v351 = vpop.permute.xlu0 %350
    %352 = vrot.lane.b32.xlu0 %v271, 64
    %v353 = vpop.permute.xlu0 %352
    %354 = vrot.lane.b32.xlu0 %v270, 64
    %v355 = vpop.permute.xlu0 %354
    %356 = vrot.lane.b32.xlu0 %v272, 64
    %v357 = vpop.permute.xlu0 %356
    %366 = vrot.lane.b32.xlu0 %v278, 96
    %v367 = vpop.permute.xlu0 %366
    %368 = vrot.lane.b32.xlu0 %v280, 96
    %v369 = vpop.permute.xlu0 %368
    %370 = vrot.lane.b32.xlu0 %v279, 96
    %v371 = vpop.permute.xlu0 %370
    %372 = vrot.lane.b32.xlu0 %v281, 96
    %v373 = vpop.permute.xlu0 %372
    %v378 = vsel %vm71, %v226, %v287
    %v379 = vsel %vm71, %v224, %v289
    %v380 = vsel %vm71, %v227, %v291
    %v381 = vsel %vm71, %v225, %v293
    %vm382 = vcmask 523264
    %v383 = vsel %vm382, %v378, %v303
    %v384 = vsel %vm382, %v379, %v305
    %v385 = vsel %vm382, %v380, %v307
    %v386 = vsel %vm382, %v381, %v309
    %vm387 = vcmask 785408
    %v388 = vsel %vm387, %v383, %v319
    %v389 = vsel %vm387, %v384, %v321
    %v390 = vsel %vm387, %v385, %v323
    %v391 = vsel %vm387, %v386, %v325
    %v392 = vsel %vm71, %v213, %v335
    %v393 = vsel %vm71, %v214, %v337
    %v394 = vsel %vm71, %v215, %v339
    %v395 = vsel %vm71, %v216, %v341
    %v396 = vsel %vm382, %v392, %v351
    %v397 = vsel %vm382, %v393, %v353
    %v398 = vsel %vm382, %v394, %v355
    %v399 = vsel %vm382, %v395, %v357
    %v400 = vsel %vm387, %v396, %v367
    %v401 = vsel %vm387, %v397, %v369
    %v402 = vsel %vm387, %v398, %v371
    %v403 = vsel %vm387, %v399, %v373
    %v404 = vld [vmem:[%s6] sm:$0xf]
    %v405 = vld [vmem:[%s6 + $0x4] sm:$0xf]
    %v406 = vld [vmem:[%s6 + $0x8] sm:$0xf]
    %v407 = vld [vmem:[%s6 + $0xc] sm:$0xf]
    %v408 = vld [vmem:[%s6 + $0x10] sm:$0xf]
    %v409 = vld [vmem:[%s6 + $0x14] sm:$0xf]
    %v410 = vld [vmem:[%s6 + $0x18] sm:$0xf]
    %v411 = vld [vmem:[%s6 + $0x1c] sm:$0xf]
    %v412 = vld [vmem:[%s6 + $0x20] sm:$0xf]
    %v413 = vld [vmem:[%s6 + $0x24] sm:$0xf]
    %v414 = vld [vmem:[%s6 + $0x28] sm:$0xf]
    %v415 = vld [vmem:[%s6 + $0x2c] sm:$0xf]
    %v416 = vld [vmem:[%s6 + $0x30] sm:$0xf]
    %v417 = vld [vmem:[%s6 + $0x34] sm:$0xf]
    %v418 = vld [vmem:[%s6 + $0x38] sm:$0xf]
    %v419 = vld [vmem:[%s6 + $0x3c] sm:$0xf]
    %v420 = vld [vmem:[%s6 + $0x40] sm:$0xf]
    %v421 = vld [vmem:[%s6 + $0x44] sm:$0xf]
    %v422 = vld [vmem:[%s6 + $0x48] sm:$0xf]
    %v423 = vld [vmem:[%s6 + $0x4c] sm:$0xf]
    %v424 = vld [vmem:[%s6 + $0x50] sm:$0xf]
    %v425 = vld [vmem:[%s6 + $0x54] sm:$0xf]
    %v426 = vld [vmem:[%s6 + $0x58] sm:$0xf]
    %v427 = vld [vmem:[%s6 + $0x5c] sm:$0xf]
    %v428 = vld [vmem:[%s6 + $0x60] sm:$0xf]
    %v429 = vld [vmem:[%s6 + $0x64] sm:$0xf]
    %v430 = vld [vmem:[%s6 + $0x68] sm:$0xf]
    %v431 = vld [vmem:[%s6 + $0x6c] sm:$0xf]
    %v432 = vld [vmem:[%s6 + $0x70] sm:$0xf]
    %v433 = vld [vmem:[%s6 + $0x74] sm:$0xf]
    %v434 = vld [vmem:[%s6 + $0x78] sm:$0xf]
    %v435 = vld [vmem:[%s6 + $0x7c] sm:$0xf]
    %v436 = vld [vmem:[%s6 + $0x80] sm:$0xf]
    %v437 = vld [vmem:[%s6 + $0x84] sm:$0xf]
    %v438 = vld [vmem:[%s6 + $0x88] sm:$0xf]
    %v439 = vld [vmem:[%s6 + $0x8c] sm:$0xf]
    %v440 = vpack.c.bf16 %v389, %v388
    %v441 = vpack.c.bf16 %v401, %v400
    %v442 = vpack.c.bf16 %v226, %v224
    %v443 = vpack.c.bf16 %v391, %v390
    %v444 = vpack.c.bf16 %v403, %v402
    %v445 = vpack.c.bf16 %v227, %v225
    %v482 = vunpack.c.l.b16 %v404
    %v483 = vunpack.c.l.b16 %v405
    %v484 = vunpack.c.l.b16 %v406
    %v485 = vunpack.c.l.b16 %v407
    %v486 = vunpack.c.l.b16 %v408
    %v487 = vunpack.c.l.b16 %v409
    %v488 = vunpack.c.l.b16 %v410
    %v489 = vunpack.c.l.b16 %v411
    %v490 = vunpack.c.l.b16 %v412
    %v491 = vunpack.c.l.b16 %v413
    %v492 = vunpack.c.l.b16 %v414
    %v493 = vunpack.c.l.b16 %v415
    %v494 = vunpack.c.l.b16 %v416
    %v495 = vunpack.c.l.b16 %v417
    %v496 = vunpack.c.l.b16 %v418
    %v497 = vunpack.c.l.b16 %v419
    %v498 = vunpack.c.l.b16 %v420
    %v499 = vunpack.c.l.b16 %v421
    %v500 = vunpack.c.l.b16 %v422
    %v501 = vunpack.c.l.b16 %v423
    %v502 = vunpack.c.l.b16 %v424
    %v503 = vunpack.c.l.b16 %v425
    %v504 = vunpack.c.l.b16 %v426
    %v505 = vunpack.c.l.b16 %v427
    %v506 = vunpack.c.l.b16 %v428
    %v507 = vunpack.c.l.b16 %v429
    %v508 = vunpack.c.l.b16 %v430
    %v509 = vunpack.c.l.b16 %v431
    %v510 = vunpack.c.l.b16 %v432
    %v511 = vunpack.c.l.b16 %v433
    %v512 = vunpack.c.l.b16 %v434
    %v513 = vunpack.c.l.b16 %v435
    %v514 = vunpack.c.l.b16 %v436
    %v515 = vunpack.c.l.b16 %v437
    %v516 = vunpack.c.l.b16 %v438
    %v517 = vunpack.c.l.b16 %v439
    %v518 = vpack.c.b16 %v483, %v482
    %v519 = vpack.c.b16 %v485, %v484
    %v520 = vpack.c.b16 %v487, %v486
    %v521 = vpack.c.b16 %v489, %v488
    %v522 = vpack.c.b16 %v491, %v490
    %v523 = vpack.c.b16 %v493, %v492
    %v524 = vpack.c.b16 %v495, %v494
    %v525 = vpack.c.b16 %v497, %v496
    %v526 = vpack.c.b16 %v499, %v498
    %v527 = vpack.c.b16 %v501, %v500
    %v528 = vpack.c.b16 %v503, %v502
    %v529 = vpack.c.b16 %v505, %v504
    %v530 = vpack.c.b16 %v507, %v506
    %v531 = vpack.c.b16 %v509, %v508
    %v532 = vpack.c.b16 %v511, %v510
    %v533 = vpack.c.b16 %v513, %v512
    %v534 = vpack.c.b16 %v515, %v514
    %v535 = vpack.c.b16 %v517, %v516
    %v555 = vsel %vm71, %v442, 0
    %v558 = vsel %vm71, %v445, 0
    %560 = vmatprep.subr.bf16.mxu0 0
    %561 = vmatpush1.bf16.msra.mxu0 %v518
    %562 = vmatprep.subr.bf16.mxu0 0
    %563 = vmatpush1.bf16.msra.mxu0 %v519
    %564 = vmatprep.subr.bf16.mxu0 0
    %565 = vmatpush1.bf16.msra.mxu0 %v520
    %566 = vmatprep.subr.bf16.mxu0 0
    %567 = vmatpush1.bf16.msra.mxu0 %v521
    %568 = vmatprep.subr.bf16.mxu0 0
    %569 = vmatpush1.bf16.msra.mxu0 %v522
    %570 = vmatprep.subr.bf16.mxu0 0
    %571 = vmatpush1.bf16.msra.mxu0 %v523
    %572 = vmatprep.subr.bf16.mxu0 0
    %573 = vmatpush1.bf16.msra.mxu0 %v524
    %574 = vmatprep.subr.bf16.mxu0 0
    %575 = vmatpush1.bf16.msra.mxu0 %v525
    %576 = vmatprep.subr.bf16.mxu0 0
    %577 = vmatpush1.bf16.msra.mxu0 %v526
    %578 = vmatprep.subr.bf16.mxu0 0
    %579 = vmatpush1.bf16.msra.mxu0 %v527
    %580 = vmatprep.subr.bf16.mxu0 0
    %581 = vmatpush1.bf16.msra.mxu0 %v528
    %582 = vmatprep.subr.bf16.mxu0 0
    %583 = vmatpush1.bf16.msra.mxu0 %v529
    %584 = vmatprep.subr.bf16.mxu0 0
    %585 = vmatpush1.bf16.msra.mxu0 %v530
    %586 = vmatprep.subr.bf16.mxu0 0
    %587 = vmatpush1.bf16.msra.mxu0 %v531
    %588 = vmatprep.subr.bf16.mxu0 0
    %589 = vmatpush1.bf16.msra.mxu0 %v532
    %590 = vmatprep.subr.bf16.mxu0 0
    %591 = vmatpush1.bf16.msra.mxu0 %v533
    %592 = vmatprep.mubr.bf16.mxu0 %v441
    %593 = vmatmul.mubr.bf16.gmra.mrb[0].mxu0 %v440
    %v594 = vpop.f32.mrb[0].mxu0
    %v595 = vadd.f32 0.0, %v594
    %v596 = vpop.f32.mrb[0].mxu0
    %v597 = vpop.f32.mrb[0].mxu0
    %v598 = vadd.f32 0.0, %v597
    %v599 = vpop.f32.mrb[0].mxu0
    %600 = vmatprep.mubr.bf16.mxu0 %v444
    %601 = vmatmul.mubr.bf16.gmra.mrb[0].mxu0 %v443
    %v602 = vpop.f32.mrb[0].mxu0
    %v603 = vadd.f32 0.0, %v602
    %v604 = vpop.f32.mrb[0].mxu0
    %v605 = vpop.f32.mrb[0].mxu0
    %v606 = vadd.f32 0.0, %v605
    %v607 = vpop.f32.mrb[0].mxu0
    %608 = vdwg.mxu0
    %609 = vmatprep.subr.bf16.mxu0 0
    %610 = vmatpush1.bf16.msra.mxu0 %v534
    %611 = vmatprep.subr.bf16.mxu0 0
    %612 = vmatpush1.bf16.msra.mxu0 %v535
    %613 = vmatprep.subr.bf16.mxu0 0
    %614 = vmatpush1.bf16.msra.mxu0 0
    %615 = vmatprep.subr.bf16.mxu0 0
    %616 = vmatpush1.bf16.msra.mxu0 0
    %617 = vmatprep.subr.bf16.mxu0 0
    %618 = vmatpush1.bf16.msra.mxu0 0
    %619 = vmatprep.subr.bf16.mxu0 0
    %620 = vmatpush1.bf16.msra.mxu0 0
    %621 = vmatprep.subr.bf16.mxu0 0
    %622 = vmatpush1.bf16.msra.mxu0 0
    %623 = vmatprep.subr.bf16.mxu0 0
    %624 = vmatpush1.bf16.msra.mxu0 0
    %625 = vmatprep.subr.bf16.mxu0 0
    %626 = vmatpush1.bf16.msra.mxu0 0
    %627 = vmatprep.subr.bf16.mxu0 0
    %628 = vmatpush1.bf16.msra.mxu0 0
    %629 = vmatprep.subr.bf16.mxu0 0
    %630 = vmatpush1.bf16.msra.mxu0 0
    %631 = vmatprep.subr.bf16.mxu0 0
    %632 = vmatpush1.bf16.msra.mxu0 0
    %633 = vmatprep.subr.bf16.mxu0 0
    %634 = vmatpush1.bf16.msra.mxu0 0
    %635 = vmatprep.subr.bf16.mxu0 0
    %636 = vmatpush1.bf16.msra.mxu0 0
    %637 = vmatprep.subr.bf16.mxu0 0
    %638 = vmatpush1.bf16.msra.mxu0 0
    %639 = vmatprep.subr.bf16.mxu0 0
    %640 = vmatpush1.bf16.msra.mxu0 0
    %641 = vmatprep.mubr.bf16.mxu0 0
    %642 = vmatmul.mubr.bf16.gmra.mrb[0].mxu0 %v555
    %v643 = vpop.f32.mrb[0].mxu0
    %v644 = vadd.f32 %v595, %v643
    %v645 = vpop.f32.mrb[0].mxu0
    %v646 = vpop.f32.mrb[0].mxu0
    %v647 = vadd.f32 %v598, %v646
    %v648 = vpop.f32.mrb[0].mxu0
    %649 = vmatprep.mubr.bf16.mxu0 0
    %650 = vmatmul.mubr.bf16.gmra.mrb[0].mxu0 %v558
    %v651 = vpop.f32.mrb[0].mxu0
    %v652 = vadd.f32 %v603, %v651
    %v653 = vpop.f32.mrb[0].mxu0
    %v654 = vpop.f32.mrb[0].mxu0
    %v655 = vadd.f32 %v606, %v654
    %v656 = vpop.f32.mrb[0].mxu0
    %657 = vdwg.mxu0
    %v658 = vld [vmem:[%s7] sm:$0x1]
    %v660 = vlaneseq
    %v661 = vshrl.u32 %v660, 7
    %v662 = vsub.s32 0, %v661
    %v663 = vrot.slane %v658, %v662
    %v665 = vadd.f32 %v644, %v663
    %v666 = vadd.f32 %v647, %v663
    %v667 = vadd.f32 %v652, %v663
    %v668 = vadd.f32 %v655, %v663
    %v669 = vld [vmem:[%s8] sm:$0x1]
    %v670 = vld [vmem:[%s9] sm:$0x1]
    %v671 = vsel %vm71, %v665, 0.0
    %v672 = vsel %vm71, %v666, 0.0
    %v673 = vadd.f32 %v671, %v672
    %v674 = vsel %vm71, %v667, 0.0
    %v675 = vadd.f32 %v673, %v674
    %v676 = vsel %vm71, %v668, 0.0
    %v677 = vadd.f32 %v675, %v676
    %v678 = vrot.slane %v677, 4
    %v679 = vadd.f32 %v677, %v678
    %v680 = vrot.slane %v679, 2
    %v681 = vadd.f32 %v679, %v680
    %v682 = vrot.slane %v681, 1
    %v683 = vadd.f32 %v681, %v682
    %v684 = vmul.f32 %v683, %v153
    %v685 = vmul.f32 %v665, %v665
    %v686 = vmul.f32 %v666, %v666
    %v687 = vmul.f32 %v667, %v667
    %v688 = vmul.f32 %v668, %v668
    %v689 = vsel %vm71, %v685, 0.0
    %v690 = vsel %vm71, %v686, 0.0
    %v691 = vadd.f32 %v689, %v690
    %v692 = vsel %vm71, %v687, 0.0
    %v693 = vadd.f32 %v691, %v692
    %v694 = vsel %vm71, %v688, 0.0
    %v695 = vadd.f32 %v693, %v694
    %v696 = vrot.slane %v695, 4
    %v697 = vadd.f32 %v695, %v696
    %v698 = vrot.slane %v697, 2
    %v699 = vadd.f32 %v697, %v698
    %v700 = vrot.slane %v699, 1
    %v701 = vadd.f32 %v699, %v700
    %v702 = vmul.f32 %v701, %v153
    %v703 = vmul.f32 %v684, %v684
    %v704 = vsub.f32 %v702, %v703
    %v705 = vsub.f32 %v665, %v684
    %v706 = vsub.f32 %v666, %v684
    %v707 = vsub.f32 %v667, %v684
    %v708 = vsub.f32 %v668, %v684
    %v709 = vadd.f32 %v704, 1e-05
    %v710 = vrsqrt.pop %v709
    %v711 = vmul.f32 %v705, %v710
    %v712 = vmul.f32 %v706, %v710
    %v713 = vmul.f32 %v707, %v710
    %v714 = vmul.f32 %v708, %v710
    %v716 = vlaneseq
    %v717 = vshrl.u32 %v716, 7
    %v718 = vsub.s32 0, %v717
    %v719 = vrot.slane %v669, %v718
    %v721 = vmul.f32 %v711, %v719
    %v722 = vmul.f32 %v712, %v719
    %v723 = vmul.f32 %v713, %v719
    %v724 = vmul.f32 %v714, %v719
    %v726 = vlaneseq
    %v727 = vshrl.u32 %v726, 7
    %v728 = vsub.s32 0, %v727
    %v729 = vrot.slane %v670, %v728
    %v731 = vadd.f32 %v721, %v729
    %v732 = vadd.f32 %v722, %v729
    %v733 = vadd.f32 %v723, %v729
    %v734 = vadd.f32 %v724, %v729
    %vm735 = vcmp.ge.f32.partialorder %v731, 0.0
    %vm736 = vcmp.ge.f32.partialorder %v732, 0.0
    %vm737 = vcmp.ge.f32.partialorder %v733, 0.0
    %vm738 = vcmp.ge.f32.partialorder %v734, 0.0
    %v739 = vmul.f32 %v731, 0.2
    %v740 = vmul.f32 %v732, 0.2
    %v741 = vmul.f32 %v733, 0.2
    %v742 = vmul.f32 %v734, 0.2
    %v743 = vsel %vm735, %v731, %v739
    %v744 = vsel %vm736, %v732, %v740
    %v745 = vsel %vm737, %v733, %v741
    %v746 = vsel %vm738, %v734, %v742
    %v747 = vadd.f32 %v743, %v213
    %v748 = vadd.f32 %v744, %v214
    %v749 = vadd.f32 %v745, %v215
    %v750 = vadd.f32 %v746, %v216
    %v751 = vmul.f32 %v747, 0.70710677
    %v752 = vmul.f32 %v748, 0.70710677
    %v753 = vmul.f32 %v749, 0.70710677
    %v754 = vmul.f32 %v750, 0.70710677
    %v755 = vld [vmem:[%s10] sm:$0xf]
    %v756 = vld [vmem:[%s10 + $0x4] sm:$0xf]
    %v757 = vld [vmem:[%s10 + $0x8] sm:$0xf]
    %v758 = vld [vmem:[%s10 + $0xc] sm:$0xf]
    %v759 = vpack.c.bf16 %v752, %v751
    %v760 = vpack.c.bf16 %v754, %v753
    %v765 = vunpack.c.l.b16 %v755
    %v766 = vunpack.c.l.b16 %v756
    %v767 = vunpack.c.l.b16 %v757
    %v768 = vunpack.c.l.b16 %v758
    %v769 = vpack.c.b16 %v766, %v765
    %v770 = vpack.c.b16 %v768, %v767
    %v774 = vsel %vm71, %v759, 0
    %v777 = vsel %vm71, %v760, 0
    %779 = vmatprep.subr.bf16.mxu0 0
    %780 = vmatpush1.bf16.msra.mxu0 %v769
    %781 = vmatprep.subr.bf16.mxu0 0
    %782 = vmatpush1.bf16.msra.mxu0 %v770
    %783 = vmatprep.subr.bf16.mxu0 0
    %784 = vmatpush1.bf16.msra.mxu0 0
    %785 = vmatprep.subr.bf16.mxu0 0
    %786 = vmatpush1.bf16.msra.mxu0 0
    %787 = vmatprep.subr.bf16.mxu0 0
    %788 = vmatpush1.bf16.msra.mxu0 0
    %789 = vmatprep.subr.bf16.mxu0 0
    %790 = vmatpush1.bf16.msra.mxu0 0
    %791 = vmatprep.subr.bf16.mxu0 0
    %792 = vmatpush1.bf16.msra.mxu0 0
    %793 = vmatprep.subr.bf16.mxu0 0
    %794 = vmatpush1.bf16.msra.mxu0 0
    %795 = vmatprep.subr.bf16.mxu0 0
    %796 = vmatpush1.bf16.msra.mxu0 0
    %797 = vmatprep.subr.bf16.mxu0 0
    %798 = vmatpush1.bf16.msra.mxu0 0
    %799 = vmatprep.subr.bf16.mxu0 0
    %800 = vmatpush1.bf16.msra.mxu0 0
    %801 = vmatprep.subr.bf16.mxu0 0
    %802 = vmatpush1.bf16.msra.mxu0 0
    %803 = vmatprep.subr.bf16.mxu0 0
    %804 = vmatpush1.bf16.msra.mxu0 0
    %805 = vmatprep.subr.bf16.mxu0 0
    %806 = vmatpush1.bf16.msra.mxu0 0
    %807 = vmatprep.subr.bf16.mxu0 0
    %808 = vmatpush1.bf16.msra.mxu0 0
    %809 = vmatprep.subr.bf16.mxu0 0
    %810 = vmatpush1.bf16.msra.mxu0 0
    %811 = vmatprep.mubr.bf16.mxu0 0
    %812 = vmatmul.mubr.bf16.gmra.mrb[0].mxu0 %v774
    %v813 = vpop.f32.mrb[0].mxu0
    %v814 = vadd.f32 0.0, %v813
    %v815 = vpop.f32.mrb[0].mxu0
    %v816 = vpop.f32.mrb[0].mxu0
    %v817 = vadd.f32 0.0, %v816
    %v818 = vpop.f32.mrb[0].mxu0
    %819 = vmatprep.mubr.bf16.mxu0 0
    %820 = vmatmul.mubr.bf16.gmra.mrb[0].mxu0 %v777
    %v821 = vpop.f32.mrb[0].mxu0
    %v822 = vadd.f32 0.0, %v821
    %v823 = vpop.f32.mrb[0].mxu0
    %v824 = vpop.f32.mrb[0].mxu0
    %v825 = vadd.f32 0.0, %v824
    %v826 = vpop.f32.mrb[0].mxu0
    %827 = vdwg.mxu0
    %v828 = vld [vmem:[%s11] sm:$0x1]
    %v830 = vlaneseq
    %v831 = vshrl.u32 %v830, 7
    %v832 = vsub.s32 0, %v831
    %v833 = vrot.slane %v828, %v832
    %v835 = vadd.f32 %v814, %v833
    %v836 = vadd.f32 %v817, %v833
    %v837 = vadd.f32 %v822, %v833
    %v838 = vadd.f32 %v825, %v833
    %v839 = vld [vmem:[%s1] sm:$0x3]
    %v840 = vld [vmem:[%s12] sm:$0xf]
    %v841 = vpack.c.bf16 %v839, %v839
    %v842 = vld [vmem:[%s13] sm:$0x1]
    %v844 = vlaneseq
    %v845 = vshrl.u32 %v844, 7
    %v846 = vsub.s32 0, %v845
    %v847 = vrot.slane %v842, %v846
    %vm849 = vcmask 64512
    %v851 = vsel %vm849, %v841, 0
    %vm853 = vcmask 1043456
    %v855 = vsel %vm853, %v840, 0
    %857 = vmatprep.subr.bf16.mxu0 0
    %858 = vmatpush1.bf16.msra.mxu0 %v855
    %859 = vmatprep.subr.bf16.mxu0 0
    %860 = vmatpush1.bf16.msra.mxu0 0
    %861 = vmatprep.subr.bf16.mxu0 0
    %862 = vmatpush1.bf16.msra.mxu0 0
    %863 = vmatprep.subr.bf16.mxu0 0
    %864 = vmatpush1.bf16.msra.mxu0 0
    %865 = vmatprep.subr.bf16.mxu0 0
    %866 = vmatpush1.bf16.msra.mxu0 0
    %867 = vmatprep.subr.bf16.mxu0 0
    %868 = vmatpush1.bf16.msra.mxu0 0
    %869 = vmatprep.subr.bf16.mxu0 0
    %870 = vmatpush1.bf16.msra.mxu0 0
    %871 = vmatprep.subr.bf16.mxu0 0
    %872 = vmatpush1.bf16.msra.mxu0 0
    %873 = vmatprep.subr.bf16.mxu0 0
    %874 = vmatpush1.bf16.msra.mxu0 0
    %875 = vmatprep.subr.bf16.mxu0 0
    %876 = vmatpush1.bf16.msra.mxu0 0
    %877 = vmatprep.subr.bf16.mxu0 0
    %878 = vmatpush1.bf16.msra.mxu0 0
    %879 = vmatprep.subr.bf16.mxu0 0
    %880 = vmatpush1.bf16.msra.mxu0 0
    %881 = vmatprep.subr.bf16.mxu0 0
    %882 = vmatpush1.bf16.msra.mxu0 0
    %883 = vmatprep.subr.bf16.mxu0 0
    %884 = vmatpush1.bf16.msra.mxu0 0
    %885 = vmatprep.subr.bf16.mxu0 0
    %886 = vmatpush1.bf16.msra.mxu0 0
    %887 = vmatprep.subr.bf16.mxu0 0
    %888 = vmatpush1.bf16.msra.mxu0 0
    %889 = vmatprep.mubr.bf16.mxu0 0
    %890 = vmatmul.mubr.bf16.gmra.mrb[0].mxu0 %v851
    %v891 = vpop.f32.mrb[0].mxu0
    %v892 = vadd.f32 %v847, %v891
    %v893 = vpop.f32.mrb[0].mxu0
    %v894 = vpop.f32.mrb[0].mxu0
    %v895 = vpop.f32.mrb[0].mxu0
    %896 = vdwg.mxu0
    %v899 = vunpack.c.l.s4 1966171168
    %v900 = vunpack.c.0.s8 %v899
    %v901 = vlaneseq
    %v902 = vshrl.u32 %v901, 7
    %v903 = vsub.s32 %v900, %v902
    %v904 = vrot.slane %v892, %v903
    %v905 = vcombine.high %v904, %v904
    %v907 = vunpack.c.l.s4 1966171168
    %v908 = vunpack.c.0.s8 %v907
    %v909 = vlaneseq
    %v910 = vshrl.u32 %v909, 7
    %v911 = vsub.s32 %v908, %v910
    %v912 = vrot.slane %v904, %v911
    %v914 = vunpack.c.l.s4 1966171168
    %v915 = vunpack.c.0.s8 %v914
    %v916 = vlaneseq
    %v917 = vshrl.u32 %v916, 7
    %v918 = vsub.s32 %v915, %v917
    %v919 = vrot.slane %v905, %v918
    %v920 = vlaneseq
    %v921 = vshrl.u32 %v920, 7
    %v922 = vsub.s32 0, %v921
    %v923 = vrot.slane %v912, %v922
    %v924 = vlaneseq
    %v925 = vshrl.u32 %v924, 7
    %v926 = vsub.s32 0, %v925
    %v927 = vrot.slane %v919, %v926
    %v930 = vmul.f32 %v835, %v923
    %v931 = vmul.f32 %v836, %v923
    %v932 = vmul.f32 %v837, %v927
    %v933 = vmul.f32 %v838, %v927
    %v934 = vsel %vm382, %v930, 0.0
    %935 = vadd.xlane.f32.xlu0 %v934
    %v936 = vpop.xlane.xlu0 %935
    %v937 = vsel %vm382, %v931, 0.0
    %938 = vadd.xlane.f32.xlu0 %v937
    %v939 = vpop.xlane.xlu0 %938
    %v940 = vsel %vm382, %v932, 0.0
    %941 = vadd.xlane.f32.xlu0 %v940
    %v942 = vpop.xlane.xlu0 %941
    %v943 = vsel %vm382, %v933, 0.0
    %944 = vadd.xlane.f32.xlu0 %v943
    %v945 = vpop.xlane.xlu0 %944
    %v946 = vmul.f32 %v936, 0.125
    %v947 = vmul.f32 %v939, 0.125
    %v948 = vmul.f32 %v942, 0.125
    %v949 = vmul.f32 %v945, 0.125
    %v954 = vlaneseq
    %v955 = vand.u32 %v954, 127
    %v956 = vlaneseq
    %v957 = vshrl.u32 %v956, 7
    %v958 = vsub.s32 %v955, %v957
    %v959 = vrot.slane %v946, %v958
    %v960 = vadd.s32 %v955, 4294967288
    %v961 = vlaneseq
    %v962 = vshrl.u32 %v961, 7
    %v963 = vsub.s32 %v960, %v962
    %v964 = vrot.slane %v947, %v963
    %vm965 = vcmask 130112
    %v966 = vsel %vm965, %v964, %v959
    %v967 = vlaneseq
    %v968 = vshrl.u32 %v967, 7
    %v969 = vsub.s32 %v955, %v968
    %v970 = vrot.slane %v948, %v969
    %v971 = vlaneseq
    %v972 = vshrl.u32 %v971, 7
    %v973 = vsub.s32 %v960, %v972
    %v974 = vrot.slane %v949, %v973
    %v975 = vsel %vm965, %v974, %v970
    %vm976 = vcmask 1041409
    %v977 = vsel %vm976, %v975, %v966
    %vm979 = vcmask 123904
    %980 = vst.msk [vmem:[#allocation2] sm:$0x3] %vm979, %v977
    // Predicated region
    $region58: #{tpu_custom_call.1} parent=1 // pred_check
      _
    $region59: #{tpu_custom_call.1} parent=1 // pred_check_branch
      %982 = sbr.rel (0) target = $region61
    $region60: #{tpu_custom_call.1} parent=1 // pred_region
      %s984 = ssub.s32 32, 32
      %985 = vsyncadd [#allocation3], %s984
      %s987 = sshll.u32 [#allocation2], 4
      %s988 = int_to_ptr.vmem [resolvable:$true] %s987
      %990 = dma.vmem_to_hbm [thread:$0]  %s988, 32, %s14, [#allocation3]
    $region61: #{tpu_custom_call.1} parent=1 // pred_fallthru
      _
    // Predicated region
    $region62: #{tpu_custom_call.1} parent=1 // pred_check
      _
    $region63: #{tpu_custom_call.1} parent=1 // pred_check_branch
      %992 = sbr.rel (0) target = $region65
    $region64: #{tpu_custom_call.1} parent=1 // pred_region
      %993 = dma.done [#allocation3], 32
    $region65: #{tpu_custom_call.1} parent=1 // pred_fallthru
      _
    %994 = vsyncpa [#allocation3], 1

</llo_original>
